<compile_context>
chip_gen: v5e
topology: v5e:2x2
jax: 0.10.0
libtpu: 0.0.40
codegen_flags: <defaults>
</compile_context>

<pallas_src>
import functools

import jax
import jax.numpy as jnp
from jax.experimental import pallas as pl
from jax.experimental.pallas import tpu as pltpu

IN_FEATURES = 4
HIDDEN = 128
OUT_FEATURES = 3
DEFAULT_TILE_N = 4096   # rows per grid step (multiple of 8); sweep 2048-8192


def _round_up(x, m):
    return (x + m - 1) // m * m


def mlp_kernel(x_ref, w1_ref, b1_ref, w2_ref, b2_ref, w3_ref, b3_ref, o_ref):
    # x_ref: (eff_tile, 4) bf16; weights bf16 (in, out); biases f32 (1, out).
    x = x_ref[...]

    # fc1 + ReLU  (bf16 MXU inputs, f32 accumulation; bias/ReLU in f32 on VPU)
    h1 = jnp.dot(x, w1_ref[...], preferred_element_type=jnp.float32) + b1_ref[...]
    h1 = jnp.maximum(h1, 0.0)

    # fc2 + ReLU
    h2 = jnp.dot(h1.astype(jnp.bfloat16), w2_ref[...],
                 preferred_element_type=jnp.float32) + b2_ref[...]
    h2 = jnp.maximum(h2, 0.0)

    # fc3 — output written at its natural 3-lane width (no HBM write padding)
    out = jnp.dot(h2.astype(jnp.bfloat16), w3_ref[...],
                  preferred_element_type=jnp.float32) + b3_ref[...]
    o_ref[...] = out.astype(o_ref.dtype)


@functools.partial(jax.jit, static_argnames=("tile_n",))
def mlp_forward(x, kernel_params, *, tile_n=DEFAULT_TILE_N):
    """x: (B, N, 4) f32. Mirrors the PyTorch forward (uses batch 0) -> (N, 3)."""
    w1, b1, w2, b2, w3, b3 = kernel_params
    _, n, f = x.shape

    # Adaptive row tiling: pad rows only to a multiple of 8, then split into
    # g = cdiv(n8, tile_n) equal tiles.  Padding waste is bounded by 8*g rows.
    tile_n = max(8, _round_up(tile_n, 8))
    n8 = _round_up(n, 8)
    g = pl.cdiv(n8, tile_n)                      # grid length
    eff_tile = _round_up(pl.cdiv(n8, g), 8)      # per-step rows, multiple of 8
    n_pad = g * eff_tile

    xb = x.astype(jnp.bfloat16)                  # cast once, not per grid step
    if n_pad != n:
        xb = jnp.pad(xb, ((0, 0), (0, n_pad - n), (0, 0)))

    # Weights/biases: whole array every step (constant index_map) -> stay
    # resident in VMEM across the row grid.
    const = lambda shape: pl.BlockSpec(shape, lambda i: tuple(0 for _ in shape))

    out = pl.pallas_call(
        mlp_kernel,
        out_shape=jax.ShapeDtypeStruct((n_pad, OUT_FEATURES), jnp.float32),
        grid=(g,),
        in_specs=[
            # Leading (batch) dim squeezed; index_map picks batch 0 during the
            # DMA, so no wrapper-side x[0] slice/copy is needed.
            pl.BlockSpec((None, eff_tile, f), lambda i: (0, i, 0)),
            const(w1.shape), const(b1.shape),
            const(w2.shape), const(b2.shape),
            const(w3.shape), const(b3.shape),
        ],
        out_specs=pl.BlockSpec((eff_tile, OUT_FEATURES), lambda i: (i, 0)),
        compiler_params=pltpu.CompilerParams(
            dimension_semantics=("parallel",)),
    )(xb, w1, b1, w2, b2, w3, b3)

    return out[:n]


def init_params(key):
    """Deterministic synthetic parameters, shapes from the module __init__.

    PyTorch nn.Linear stores weight as (out, in); we store the transpose
    (in, out) so the kernel computes x @ W directly. Biases kept 2D (1, out).
    """
    k1, k2, k3, k4, k5, k6 = jax.random.split(key, 6)
    w1 = jax.random.normal(k1, (IN_FEATURES, HIDDEN), jnp.float32) * 0.1
    b1 = jax.random.normal(k2, (1, HIDDEN), jnp.float32) * 0.1
    w2 = jax.random.normal(k3, (HIDDEN, HIDDEN), jnp.float32) * 0.1
    b2 = jax.random.normal(k4, (1, HIDDEN), jnp.float32) * 0.1
    w3 = jax.random.normal(k5, (HIDDEN, OUT_FEATURES), jnp.float32) * 0.1
    b3 = jax.random.normal(k6, (1, OUT_FEATURES), jnp.float32) * 0.1
    return (w1, b1, w2, b2, w3, b3)


def prepare_kernel_params(params):
    """One-time prep: bf16 weights for the MXU; biases stay f32."""
    w1, b1, w2, b2, w3, b3 = params
    return (w1.astype(jnp.bfloat16), b1,
            w2.astype(jnp.bfloat16), b2,
            w3.astype(jnp.bfloat16), b3)


def reference_forward(x, params):
    """Pure-JAX f32 reference of the PyTorch forward (for correctness check)."""
    w1, b1, w2, b2, w3, b3 = params
    h = x[0]
    h = jnp.maximum(h @ w1 + b1, 0.0)
    h = jnp.maximum(h @ w2 + b2, 0.0)
    return h @ w3 + b3


if __name__ == "__main__":
    key = jax.random.PRNGKey(0)
    k_params, k_x, k_x2 = jax.random.split(key, 3)

    params = init_params(k_params)
    kparams = prepare_kernel_params(params)

    # Small test: (B=2, N=8, 4) f32; forward uses x[0] -> (8, 4), output (8, 3).
    x = jax.random.normal(k_x, (2, 8, 4), jnp.float32)
    out = jax.block_until_ready(mlp_forward(x, kparams))
    ref = reference_forward(x, params)
    assert out.shape == (8, 3), out.shape
    # bf16 matmul inputs (f32 accumulation) vs an all-f32 reference.
    assert jnp.allclose(out, ref, atol=5e-2, rtol=5e-2), "mismatch vs reference"

    # Ragged-N test exercising the multi-step grid + adaptive tiling path
    # (n=200 not a multiple of the tile; small tile_n forces grid > 1).
    x2 = jax.random.normal(k_x2, (2, 200, 4), jnp.float32)
    out2 = jax.block_until_ready(mlp_forward(x2, kparams, tile_n=64))
    ref2 = reference_forward(x2, params)
    assert out2.shape == (200, 3), out2.shape
    assert jnp.allclose(out2, ref2, atol=5e-2, rtol=5e-2), "mismatch (ragged N)"

    print("KERNEL_OK")
</pallas_src>

<mosaic_0001>
module attributes {stable_mosaic.version = 11 : i64} {
  func.func @mlp_kernel(%arg0: i32, %arg1: memref<1x8x4xbf16, #tpu.memory_space<vmem>>, %arg2: memref<4x128xbf16, #tpu.memory_space<vmem>>, %arg3: memref<1x128xf32, #tpu.memory_space<vmem>>, %arg4: memref<128x128xbf16, #tpu.memory_space<vmem>>, %arg5: memref<1x128xf32, #tpu.memory_space<vmem>>, %arg6: memref<128x3xbf16, #tpu.memory_space<vmem>>, %arg7: memref<1x3xf32, #tpu.memory_space<vmem>>, %arg8: memref<8x3xf32, #tpu.memory_space<vmem>>) attributes {dimension_semantics = [#tpu.dimension_semantics<parallel>], iteration_bounds = array<i64: 1>, scalar_prefetch = 0 : i64, scratch_operands = 0 : i64, tpu.core_type = #tpu.core_type<tc>, window_params = [{transform_indices = @transform_0, window_bounds = array<i64: 1, 8, 4>}, {pipeline_mode = #tpu.pipeline_mode<synchronous>, transform_indices = @transform_1, window_bounds = array<i64: 4, 128>}, {pipeline_mode = #tpu.pipeline_mode<synchronous>, transform_indices = @transform_2, window_bounds = array<i64: 1, 128>}, {pipeline_mode = #tpu.pipeline_mode<synchronous>, transform_indices = @transform_3, window_bounds = array<i64: 128, 128>}, {pipeline_mode = #tpu.pipeline_mode<synchronous>, transform_indices = @transform_4, window_bounds = array<i64: 1, 128>}, {pipeline_mode = #tpu.pipeline_mode<synchronous>, transform_indices = @transform_5, window_bounds = array<i64: 128, 3>}, {pipeline_mode = #tpu.pipeline_mode<synchronous>, transform_indices = @transform_6, window_bounds = array<i64: 1, 3>}, {transform_indices = @transform_7, window_bounds = array<i64: 8, 3>}]} {
    %c0 = arith.constant 0 : index
    %c0_0 = arith.constant 0 : index
    %c0_1 = arith.constant 0 : index
    %0 = vector.load %arg1[%c0, %c0_0, %c0_1] : memref<1x8x4xbf16, #tpu.memory_space<vmem>>, vector<1x8x4xbf16>
    %1 = vector.shape_cast %0 : vector<1x8x4xbf16> to vector<8x4xbf16>
    %c0_2 = arith.constant 0 : index
    %c0_3 = arith.constant 0 : index
    %2 = vector.load %arg2[%c0_2, %c0_3] : memref<4x128xbf16, #tpu.memory_space<vmem>>, vector<4x128xbf16>
    %cst = arith.constant dense<0.000000e+00> : vector<8x128xf32>
    %3 = tpu.matmul %1, %2, %cst {dimension_numbers = #tpu.dot_dimension_numbers<[1], [0], [0], [1], [0, 0, 1, 1], [], []>} : vector<8x4xbf16>, vector<4x128xbf16>, vector<8x128xf32> -> vector<8x128xf32>
    %c0_4 = arith.constant 0 : index
    %c0_5 = arith.constant 0 : index
    %4 = vector.load %arg3[%c0_4, %c0_5] : memref<1x128xf32, #tpu.memory_space<vmem>>, vector<1x128xf32>
    %5 = vector.broadcast %4 : vector<1x128xf32> to vector<8x128xf32>
    %6 = arith.addf %3, %5 : vector<8x128xf32>
    %cst_6 = arith.constant 0.000000e+00 : f32
    %7 = vector.broadcast %cst_6 : f32 to vector<8x128xf32>
    %8 = arith.maximumf %6, %7 : vector<8x128xf32>
    %9 = arith.truncf %8 : vector<8x128xf32> to vector<8x128xbf16>
    %c0_7 = arith.constant 0 : index
    %c0_8 = arith.constant 0 : index
    %10 = vector.load %arg4[%c0_7, %c0_8] : memref<128x128xbf16, #tpu.memory_space<vmem>>, vector<128x128xbf16>
    %cst_9 = arith.constant dense<0.000000e+00> : vector<8x128xf32>
    %11 = tpu.matmul %9, %10, %cst_9 {dimension_numbers = #tpu.dot_dimension_numbers<[1], [0], [0], [1], [0, 0, 1, 1], [], []>} : vector<8x128xbf16>, vector<128x128xbf16>, vector<8x128xf32> -> vector<8x128xf32>
    %c0_10 = arith.constant 0 : index
    %c0_11 = arith.constant 0 : index
    %12 = vector.load %arg5[%c0_10, %c0_11] : memref<1x128xf32, #tpu.memory_space<vmem>>, vector<1x128xf32>
    %13 = vector.broadcast %12 : vector<1x128xf32> to vector<8x128xf32>
    %14 = arith.addf %11, %13 : vector<8x128xf32>
    %cst_12 = arith.constant 0.000000e+00 : f32
    %15 = vector.broadcast %cst_12 : f32 to vector<8x128xf32>
    %16 = arith.maximumf %14, %15 : vector<8x128xf32>
    %17 = arith.truncf %16 : vector<8x128xf32> to vector<8x128xbf16>
    %c0_13 = arith.constant 0 : index
    %c0_14 = arith.constant 0 : index
    %18 = vector.load %arg6[%c0_13, %c0_14] : memref<128x3xbf16, #tpu.memory_space<vmem>>, vector<128x3xbf16>
    %cst_15 = arith.constant dense<0.000000e+00> : vector<8x3xf32>
    %19 = tpu.matmul %17, %18, %cst_15 {dimension_numbers = #tpu.dot_dimension_numbers<[1], [0], [0], [1], [0, 0, 1, 1], [], []>} : vector<8x128xbf16>, vector<128x3xbf16>, vector<8x3xf32> -> vector<8x3xf32>
    %c0_16 = arith.constant 0 : index
    %c0_17 = arith.constant 0 : index
    %20 = vector.load %arg7[%c0_16, %c0_17] : memref<1x3xf32, #tpu.memory_space<vmem>>, vector<1x3xf32>
    %21 = vector.broadcast %20 : vector<1x3xf32> to vector<8x3xf32>
    %22 = arith.addf %19, %21 : vector<8x3xf32>
    %c0_18 = arith.constant 0 : index
    %c0_19 = arith.constant 0 : index
    %23 = vector.load %arg8[%c0_18, %c0_19] : memref<8x3xf32, #tpu.memory_space<vmem>>, vector<8x3xf32>
    tpu.vector_store %arg8[%c0_18, %c0_19], %22 {strides = array<i32>} : memref<8x3xf32, #tpu.memory_space<vmem>>, vector<8x3xf32>,
    return
  }
  func.func @transform_0(%arg0: i32) -> (i32, i32, i32) {
    %c0_i32 = arith.constant 0 : i32
    %c0_i32_0 = arith.constant 0 : i32
    %c0_i32_1 = arith.constant 0 : i32
    return %c0_i32, %arg0, %c0_i32_0 : i32, i32, i32
  }
  func.func @transform_1(%arg0: i32) -> (i32, i32) {
    %c0_i32 = arith.constant 0 : i32
    %c0_i32_0 = arith.constant 0 : i32
    %c0_i32_1 = arith.constant 0 : i32
    return %c0_i32, %c0_i32_0 : i32, i32
  }
  func.func @transform_2(%arg0: i32) -> (i32, i32) {
    %c0_i32 = arith.constant 0 : i32
    %c0_i32_0 = arith.constant 0 : i32
    %c0_i32_1 = arith.constant 0 : i32
    return %c0_i32, %c0_i32_0 : i32, i32
  }
  func.func @transform_3(%arg0: i32) -> (i32, i32) {
    %c0_i32 = arith.constant 0 : i32
    %c0_i32_0 = arith.constant 0 : i32
    %c0_i32_1 = arith.constant 0 : i32
    return %c0_i32, %c0_i32_0 : i32, i32
  }
  func.func @transform_4(%arg0: i32) -> (i32, i32) {
    %c0_i32 = arith.constant 0 : i32
    %c0_i32_0 = arith.constant 0 : i32
    %c0_i32_1 = arith.constant 0 : i32
    return %c0_i32, %c0_i32_0 : i32, i32
  }
  func.func @transform_5(%arg0: i32) -> (i32, i32) {
    %c0_i32 = arith.constant 0 : i32
    %c0_i32_0 = arith.constant 0 : i32
    %c0_i32_1 = arith.constant 0 : i32
    return %c0_i32, %c0_i32_0 : i32, i32
  }
  func.func @transform_6(%arg0: i32) -> (i32, i32) {
    %c0_i32 = arith.constant 0 : i32
    %c0_i32_0 = arith.constant 0 : i32
    %c0_i32_1 = arith.constant 0 : i32
    return %c0_i32, %c0_i32_0 : i32, i32
  }
  func.func @transform_7(%arg0: i32) -> (i32, i32) {
    %c0_i32 = arith.constant 0 : i32
    %c0_i32_0 = arith.constant 0 : i32
    return %arg0, %c0_i32 : i32, i32
  }
}

</mosaic_0001>

<llo_original>
// kernel: mlp_forward.1
$region0: #{mlp_forward.1}
  #allocation0 [shape = 'u32[]', space=smem, size = 0x4, offset = 0x4, fixed_abs, tag = 'smem constant byte address 0x4 - core index']
  #allocation1 [shape = 'u32[72,128]{1,0:T(1,128)}', space=vmem, size = 0x9000, scoped, tag = 'internal scratch']
  %s0 = inlined_call_operand.vmem [shape: bf16[2,8,4], index: 0, kind: input, shape index: {}]
  %s1 = inlined_call_operand.vmem [shape: bf16[4,128], index: 1, kind: input, shape index: {}]
  %s2 = inlined_call_operand.vmem [shape: f32[1,128], index: 2, kind: input, shape index: {}]
  %s3 = inlined_call_operand.vmem [shape: bf16[128,128], index: 3, kind: input, shape index: {}]
  %s4 = inlined_call_operand.vmem [shape: f32[1,128], index: 4, kind: input, shape index: {}]
  %s5 = inlined_call_operand.vmem [shape: bf16[128,3], index: 5, kind: input, shape index: {}]
  %s6 = inlined_call_operand.vmem [shape: f32[1,3], index: 6, kind: input, shape index: {}]
  %s7 = inlined_call_operand.vmem [shape: f32[8,3], index: 7, kind: output, shape index: {}]
  %s8 = sld [smem:[#allocation0]]
  $region38: #{mlp_forward.1} parent=0
    _
  %s10 = ssub.s32 1, %s8
  %s11 = scalar_select 0, %s10, %s8
  // Predicated region
  $region2: #{mlp_forward.1} parent=0 // pred_check
    _
  $region3: #{mlp_forward.1} parent=0 // pred_check_branch
    %13 = sbr.rel (0) target = $region5
  $region4: #{mlp_forward.1} parent=0 // pred_region
    _
  $region5: #{mlp_forward.1} parent=0 // pred_fallthru
    _
  // Predicated region
  $region6: #{mlp_forward.1} parent=0 // pred_check
    _
  $region7: #{mlp_forward.1} parent=0 // pred_check_branch
    %15 = sbr.rel (0) target = $region9
  $region8: #{mlp_forward.1} parent=0 // pred_region
    _
  $region9: #{mlp_forward.1} parent=0 // pred_fallthru
    _
  // Predicated region
  $region10: #{mlp_forward.1} parent=0 // pred_check
    _
  $region11: #{mlp_forward.1} parent=0 // pred_check_branch
    %17 = sbr.rel (0) target = $region13
  $region12: #{mlp_forward.1} parent=0 // pred_region
    _
  $region13: #{mlp_forward.1} parent=0 // pred_fallthru
    _
  // Predicated region
  $region14: #{mlp_forward.1} parent=0 // pred_check
    _
  $region15: #{mlp_forward.1} parent=0 // pred_check_branch
    %19 = sbr.rel (0) target = $region17
  $region16: #{mlp_forward.1} parent=0 // pred_region
    _
  $region17: #{mlp_forward.1} parent=0 // pred_fallthru
    _
  // Predicated region
  $region18: #{mlp_forward.1} parent=0 // pred_check
    _
  $region19: #{mlp_forward.1} parent=0 // pred_check_branch
    %21 = sbr.rel (0) target = $region21
  $region20: #{mlp_forward.1} parent=0 // pred_region
    _
  $region21: #{mlp_forward.1} parent=0 // pred_fallthru
    _
  // Predicated region
  $region22: #{mlp_forward.1} parent=0 // pred_check
    _
  $region23: #{mlp_forward.1} parent=0 // pred_check_branch
    %23 = sbr.rel (0) target = $region25
  $region24: #{mlp_forward.1} parent=0 // pred_region
    _
  $region25: #{mlp_forward.1} parent=0 // pred_fallthru
    _
  // Predicated region
  $region26: #{mlp_forward.1} parent=0 // pred_check
    _
  $region27: #{mlp_forward.1} parent=0 // pred_check_branch
    %25 = sbr.rel (0) target = $region29
  $region28: #{mlp_forward.1} parent=0 // pred_region
    _
  $region29: #{mlp_forward.1} parent=0 // pred_fallthru
    _
  %v27 = vld [vmem:[%s0] sm:$0xf]
  %v28 = vld [vmem:[%s1] sm:$0x3]
  %v29 = vld [vmem:[%s2] sm:$0x1]
  %v31 = vperm.slane %v29, 0
  %vm33 = vcmask 31744
  %v35 = vsel %vm33, %v27, 0
  %vm37 = vcmask 1041408
  %v39 = vsel %vm37, %v28, 0
  %41 = vmatpush.bf16.msra.mxu0 0
  %42 = vmatpush.bf16.msra.mxu0 0
  %43 = vmatpush.bf16.msra.mxu0 0
  %44 = vmatpush.bf16.msra.mxu0 0
  %45 = vmatpush.bf16.msra.mxu0 0
  %46 = vmatpush.bf16.msra.mxu0 0
  %47 = vmatpush.bf16.msra.mxu0 0
  %48 = vmatpush.bf16.msra.mxu0 %v39
  %49 = vmatmul.bf16.gmra.mxu0 %v35
  %v50 = vpop.f32.mrf.mxu0
  %v51 = vadd.f32 %v31, %v50
  %v52 = vpop.f32.mrf.mxu0
  %53 = vdwg.mxu0
  %v54 = vmax.f32 %v51, 0.0
  %v55 = vpack.c.bf16 %v54, %v54
  %v56 = vld [vmem:[%s3] sm:$0xf]
  %v57 = vld [vmem:[%s3 + $0x4] sm:$0xf]
  %v58 = vld [vmem:[%s3 + $0x8] sm:$0xf]
  %v59 = vld [vmem:[%s3 + $0xc] sm:$0xf]
  %v60 = vld [vmem:[%s3 + $0x10] sm:$0xf]
  %v61 = vld [vmem:[%s3 + $0x14] sm:$0xf]
  %v62 = vld [vmem:[%s3 + $0x18] sm:$0xf]
  %v63 = vld [vmem:[%s3 + $0x1c] sm:$0xf]
  %v64 = vld [vmem:[%s3 + $0x20] sm:$0xf]
  %v65 = vld [vmem:[%s3 + $0x24] sm:$0xf]
  %v66 = vld [vmem:[%s3 + $0x28] sm:$0xf]
  %v67 = vld [vmem:[%s3 + $0x2c] sm:$0xf]
  %v68 = vld [vmem:[%s3 + $0x30] sm:$0xf]
  %v69 = vld [vmem:[%s3 + $0x34] sm:$0xf]
  %v70 = vld [vmem:[%s3 + $0x38] sm:$0xf]
  %v71 = vld [vmem:[%s3 + $0x3c] sm:$0xf]
  %v72 = vld [vmem:[%s4] sm:$0x1]
  %v74 = vperm.slane %v72, 0
  %v92 = vunpack.c.l.b16 %v56
  %v93 = vunpack.c.l.b16 %v57
  %v94 = vunpack.c.l.b16 %v58
  %v95 = vunpack.c.l.b16 %v59
  %v96 = vunpack.c.l.b16 %v60
  %v97 = vunpack.c.l.b16 %v61
  %v98 = vunpack.c.l.b16 %v62
  %v99 = vunpack.c.l.b16 %v63
  %v100 = vunpack.c.l.b16 %v64
  %v101 = vunpack.c.l.b16 %v65
  %v102 = vunpack.c.l.b16 %v66
  %v103 = vunpack.c.l.b16 %v67
  %v104 = vunpack.c.l.b16 %v68
  %v105 = vunpack.c.l.b16 %v69
  %v106 = vunpack.c.l.b16 %v70
  %v107 = vunpack.c.l.b16 %v71
  %v108 = vpack.c.b16 %v93, %v92
  %v109 = vpack.c.b16 %v95, %v94
  %v110 = vpack.c.b16 %v97, %v96
  %v111 = vpack.c.b16 %v99, %v98
  %v112 = vpack.c.b16 %v101, %v100
  %v113 = vpack.c.b16 %v103, %v102
  %v114 = vpack.c.b16 %v105, %v104
  %v115 = vpack.c.b16 %v107, %v106
  %124 = vmatpush.bf16.msra.mxu0 %v115
  %125 = vmatpush.bf16.msra.mxu0 %v114
  %126 = vmatpush.bf16.msra.mxu0 %v113
  %127 = vmatpush.bf16.msra.mxu0 %v112
  %128 = vmatpush.bf16.msra.mxu0 %v111
  %129 = vmatpush.bf16.msra.mxu0 %v110
  %130 = vmatpush.bf16.msra.mxu0 %v109
  %131 = vmatpush.bf16.msra.mxu0 %v108
  %132 = vmatmul.bf16.gmra.mxu0 %v55
  %v133 = vpop.f32.mrf.mxu0
  %v134 = vadd.f32 %v74, %v133
  %v135 = vpop.f32.mrf.mxu0
  %136 = vdwg.mxu0
  %v137 = vmax.f32 %v134, 0.0
  %v138 = vpack.c.bf16 %v137, %v137
  %v139 = vld [vmem:[%s5] sm:$0xf]
  %v140 = vld [vmem:[%s5 + $0x4] sm:$0xf]
  %v141 = vld [vmem:[%s5 + $0x8] sm:$0xf]
  %v142 = vld [vmem:[%s5 + $0xc] sm:$0xf]
  %v143 = vld [vmem:[%s5 + $0x10] sm:$0xf]
  %v144 = vld [vmem:[%s5 + $0x14] sm:$0xf]
  %v145 = vld [vmem:[%s5 + $0x18] sm:$0xf]
  %v146 = vld [vmem:[%s5 + $0x1c] sm:$0xf]
  %v147 = vld [vmem:[%s5 + $0x20] sm:$0xf]
  %v148 = vld [vmem:[%s5 + $0x24] sm:$0xf]
  %v149 = vld [vmem:[%s5 + $0x28] sm:$0xf]
  %v150 = vld [vmem:[%s5 + $0x2c] sm:$0xf]
  %v151 = vld [vmem:[%s5 + $0x30] sm:$0xf]
  %v152 = vld [vmem:[%s5 + $0x34] sm:$0xf]
  %v153 = vld [vmem:[%s5 + $0x38] sm:$0xf]
  %v154 = vld [vmem:[%s5 + $0x3c] sm:$0xf]
  %v155 = vld [vmem:[%s6] sm:$0x1]
  %v157 = vperm.slane %v155, 0
  %v175 = vunpack.c.l.b16 %v139
  %v176 = vunpack.c.l.b16 %v140
  %v177 = vunpack.c.l.b16 %v141
  %v178 = vunpack.c.l.b16 %v142
  %v179 = vunpack.c.l.b16 %v143
  %v180 = vunpack.c.l.b16 %v144
  %v181 = vunpack.c.l.b16 %v145
  %v182 = vunpack.c.l.b16 %v146
  %v183 = vunpack.c.l.b16 %v147
  %v184 = vunpack.c.l.b16 %v148
  %v185 = vunpack.c.l.b16 %v149
  %v186 = vunpack.c.l.b16 %v150
  %v187 = vunpack.c.l.b16 %v151
  %v188 = vunpack.c.l.b16 %v152
  %v189 = vunpack.c.l.b16 %v153
  %v190 = vunpack.c.l.b16 %v154
  %v191 = vpack.c.b16 %v176, %v175
  %v192 = vpack.c.b16 %v178, %v177
  %v193 = vpack.c.b16 %v180, %v179
  %v194 = vpack.c.b16 %v182, %v181
  %v195 = vpack.c.b16 %v184, %v183
  %v196 = vpack.c.b16 %v186, %v185
  %v197 = vpack.c.b16 %v188, %v187
  %v198 = vpack.c.b16 %v190, %v189
  %207 = vmatpush.bf16.msra.mxu0 %v198
  %208 = vmatpush.bf16.msra.mxu0 %v197
  %209 = vmatpush.bf16.msra.mxu0 %v196
  %210 = vmatpush.bf16.msra.mxu0 %v195
  %211 = vmatpush.bf16.msra.mxu0 %v194
  %212 = vmatpush.bf16.msra.mxu0 %v193
  %213 = vmatpush.bf16.msra.mxu0 %v192
  %214 = vmatpush.bf16.msra.mxu0 %v191
  %215 = vmatmul.bf16.gmra.mxu0 %v138
  %v216 = vpop.f32.mrf.mxu0
  %v217 = vadd.f32 %v157, %v216
  %v218 = vpop.f32.mrf.mxu0
  %219 = vdwg.mxu0
  %vm220 = vcmask 23552
  %221 = vst.msk [vmem:[%s7] sm:$0xff] %vm220, %v217
  // Predicated region
  $region30: #{mlp_forward.1} parent=0 // pred_check
    _
  $region31: #{mlp_forward.1} parent=0 // pred_check_branch
    %223 = sbr.rel (0) target = $region33
  $region32: #{mlp_forward.1} parent=0 // pred_region
    _
  $region33: #{mlp_forward.1} parent=0 // pred_fallthru
    _
  // Predicated region
  $region34: #{mlp_forward.1} parent=0 // pred_check
    _
  $region35: #{mlp_forward.1} parent=0 // pred_check_branch
    %225 = sbr.rel (0) target = $region37
  $region36: #{mlp_forward.1} parent=0 // pred_region
    _
  $region37: #{mlp_forward.1} parent=0 // pred_fallthru
    _

</llo_original>
